<compile_context>
chip_gen: v7x
topology: tpu7x:2x2x1
jax: 0.10.0
libtpu: 0.0.40
codegen_flags: <defaults>
</compile_context>

<pallas_src>
import jax
import jax.numpy as jnp
from jax.experimental import pallas as pl
from jax.experimental.pallas import tpu as pltpu


def value_mlp_kernel(x_ref, w1_ref, b1_ref, w2_ref, b2_ref, w3_ref, b3_ref, o_ref):
    mm_dtype = w1_ref.dtype
    # Hidden layer 1: bf16 MXU matmul with f32 accumulation; bias + ReLU in f32.
    h1 = jnp.dot(x_ref[...].astype(mm_dtype), w1_ref[...],
                 preferred_element_type=jnp.float32)
    h1 = jnp.maximum(h1 + b1_ref[...], 0.0)
    # Hidden layer 2.
    h2 = jnp.dot(h1.astype(mm_dtype), w2_ref[...],
                 preferred_element_type=jnp.float32)
    h2 = jnp.maximum(h2 + b2_ref[...], 0.0)
    # Output layer Linear(H, 1), lane-dense: contract the (1, H) w3 row against
    # h2 (bm, H) over H -> (1, bm) with batch on the lane axis (unmasked store).
    v = jax.lax.dot_general(
        w3_ref[...], h2,
        dimension_numbers=(((1,), (1,)), ((), ())),
        preferred_element_type=jnp.float32)                      # (1, bm)
    # b3 is a scalar living in SMEM.
    o_ref[...] = (v + b3_ref[0, 0]).reshape(o_ref.shape).astype(o_ref.dtype)


def _round_up(x, m):
    return ((x + m - 1) // m) * m


def _physical_vmem_bytes():
    try:
        return int(pltpu.get_tpu_info().vmem_capacity_bytes)
    except Exception:
        return 64 * 1024 * 1024          # conservative (v7x per-TC VMEM)


def _vmem_footprint_bytes(bm, state_dim, H, mm_bytes):
    """(8,128)-tiling-aware VMEM footprint estimate for one grid step."""
    f32 = 4
    sd_l = _round_up(state_dim, 128)
    h_l = _round_up(H, 128)
    bm_s = _round_up(bm, 8)
    w_sub = 8 * (4 // mm_bytes)                      # sublane align: 8 (f32) / 16 (bf16)
    total = 0
    total += 2 * bm_s * sd_l * f32                   # streamed state tile (double-buffered)
    total += 2 * 8 * _round_up(bm, 128) * f32        # streamed (1, bm) output rows (double-buf)
    total += _round_up(state_dim, w_sub) * h_l * mm_bytes   # W1 (single-buffered, Buffered(1))
    total += _round_up(H, w_sub) * h_l * mm_bytes           # W2 (single-buffered)
    total += 3 * 8 * h_l * f32                       # b1, b2, w3_row (padded to 8 sublanes)
    total += 2 * bm_s * h_l * f32                    # live h1, h2 intermediates (f32)
    total += bm_s * (sd_l + h_l) * mm_bytes          # bf16 copies of x and h1
    return total


def _choose_block_batch(B, state_dim, H, mm_bytes, vmem_budget):
    """Pick a 128-multiple batch tile sized for DMA per step and VMEM budget."""
    if B < 128:
        # Tiny batch: a single full-batch step (masked stores acceptable here).
        return B
    sd_l = _round_up(state_dim, 128)
    # Target ~4 MiB of lane-padded streamed state bytes per grid step.
    bm = (4 * 1024 * 1024) // (4 * sd_l)
    bm = max(128, min(8192, (bm // 128) * 128))
    bm = min(bm, _round_up(B, 128))
    # Prefer >= 2 grid steps: enables input/output pipelining and keeps both
    # TensorCores busy on v7x when dimension_semantics=("parallel",).
    while bm > 128 and _round_up(B, bm) // bm < 2:
        bm -= 128
    # Shrink until the padding-aware footprint fits the VMEM budget.
    while bm > 128 and _vmem_footprint_bytes(bm, state_dim, H, mm_bytes) > vmem_budget:
        bm -= 128
    return bm


def value_function_forward(state, params, *, block_batch=None,
                           matmul_dtype=jnp.bfloat16):
    """Runs the ValueFunction MLP.  state: (B, state_dim) f32 -> (B,) f32."""
    w1, b1, w2, b2, w3_row, b3 = params
    B, state_dim = state.shape
    H = w1.shape[1]
    mm_bytes = jnp.dtype(matmul_dtype).itemsize

    # Generation-aware VMEM cap: ~3/4 of physical per-core VMEM, never above
    # 100 MiB (v5e/v6e have 128 MiB, v7x has 64 MiB per TensorCore).
    phys_vmem = _physical_vmem_bytes()
    vmem_cap = min((phys_vmem * 3) // 4, 100 * 1024 * 1024)

    if block_batch is None:
        bm = _choose_block_batch(B, state_dim, H, mm_bytes, vmem_cap)
    else:
        bm = block_batch
    assert bm == B or bm % 128 == 0, \
        "block_batch must be a multiple of 128 (lane-dense stores) or equal B"

    # Pad the batch to a multiple of bm (sliced back off at the end).
    B_pad = _round_up(B, bm)
    if B_pad != B:
        state = jnp.pad(state, ((0, B_pad - B), (0, 0)))
    nb = B_pad // bm

    # MXU wants bf16 inputs (f32 x f32 is emulated multi-pass); cast weights
    # once in the wrapper so the resident VMEM copies are already narrow.
    w1_mm = w1.astype(matmul_dtype)
    w2_mm = w2.astype(matmul_dtype)

    footprint = _vmem_footprint_bytes(bm, state_dim, H, mm_bytes)
    vmem_limit = int(min(max(32 * 1024 * 1024, (footprint * 5) // 4), vmem_cap))

    cost = pl.CostEstimate(
        flops=2 * B_pad * (state_dim * H + H * H + H),
        transcendentals=0,
        bytes_accessed=(4 * B_pad * state_dim + 4 * B_pad
                        + mm_bytes * (state_dim * H + H * H)
                        + 4 * (3 * H + 1)))

    resident = dict(pipeline_mode=pl.Buffered(1))   # single-buffer invariant operands

    out = pl.pallas_call(
        value_mlp_kernel,
        out_shape=jax.ShapeDtypeStruct((nb, 1, bm), jnp.float32),
        grid_spec=pltpu.PrefetchScalarGridSpec(
            num_scalar_prefetch=0,
            grid=(nb,),
            in_specs=[
                pl.BlockSpec((bm, state_dim), lambda i: (i, 0)),             # state tile (streamed)
                pl.BlockSpec((state_dim, H), lambda i: (0, 0), **resident),  # W1 (resident, bf16)
                pl.BlockSpec((1, H), lambda i: (0, 0), **resident),          # b1
                pl.BlockSpec((H, H), lambda i: (0, 0), **resident),          # W2 (resident, bf16)
                pl.BlockSpec((1, H), lambda i: (0, 0), **resident),          # b2
                pl.BlockSpec((1, H), lambda i: (0, 0), **resident),          # W3 as a (1, H) row
                pl.BlockSpec(memory_space=pltpu.MemorySpace.SMEM),           # b3 scalar in SMEM
            ],
            out_specs=pl.BlockSpec((1, 1, bm), lambda i: (i, 0, 0)),         # lane-dense rows
        ),
        compiler_params=pltpu.CompilerParams(
            dimension_semantics=("parallel",),
            vmem_limit_bytes=vmem_limit),
        cost_estimate=cost,
    )(state, w1_mm, b1, w2_mm, b2, w3_row, b3)

    # (nb, 1, bm) -> (B_pad,) -> (B,)   (also realizes PyTorch's Squeeze(-1)).
    return out.reshape(B_pad)[:B]


def init_value_function_params(key, state_dim, hidden_dim):
    """Deterministic synthetic init matching PyTorch Linear shapes
    (stored transposed as (in, out); W3 stored as a (1, H) row)."""
    k1, k2, k3, k4, k5, k6 = jax.random.split(key, 6)
    scale1 = 1.0 / jnp.sqrt(state_dim)
    scale2 = 1.0 / jnp.sqrt(hidden_dim)
    w1 = jax.random.uniform(k1, (state_dim, hidden_dim), jnp.float32, -scale1, scale1)
    b1 = jax.random.uniform(k2, (1, hidden_dim), jnp.float32, -scale1, scale1)
    w2 = jax.random.uniform(k3, (hidden_dim, hidden_dim), jnp.float32, -scale2, scale2)
    b2 = jax.random.uniform(k4, (1, hidden_dim), jnp.float32, -scale2, scale2)
    w3_row = jax.random.uniform(k5, (1, hidden_dim), jnp.float32, -scale2, scale2)
    b3 = jax.random.uniform(k6, (1, 1), jnp.float32, -scale2, scale2)
    return (w1, b1, w2, b2, w3_row, b3)


def _reference(state, params, matmul_dtype=jnp.bfloat16):
    """Pure-JAX reference with the same bf16-input / f32-accumulate numerics."""
    w1, b1, w2, b2, w3_row, b3 = params
    md = matmul_dtype
    h1 = jnp.maximum(jnp.dot(state.astype(md), w1.astype(md),
                             preferred_element_type=jnp.float32) + b1, 0.0)
    h2 = jnp.maximum(jnp.dot(h1.astype(md), w2.astype(md),
                             preferred_element_type=jnp.float32) + b2, 0.0)
    return jnp.dot(h2, w3_row[0], preferred_element_type=jnp.float32) + b3[0, 0]


if __name__ == "__main__":
    # Small shapes consistent with ValueFunction; B=256 exercises a 2-step
    # grid (bm=128) with lane-dense, unmasked output stores.
    B, state_dim, hidden_dim = 256, 16, 32

    key = jax.random.PRNGKey(0)
    k_state, k_params = jax.random.split(key)
    state = jax.random.normal(k_state, (B, state_dim), dtype=jnp.float32)
    params = init_value_function_params(k_params, state_dim, hidden_dim)

    v = value_function_forward(state, params)
    v = jax.block_until_ready(v)

    v_ref = _reference(state, params)
    assert v.shape == (B,)
    assert jnp.allclose(v, v_ref, atol=1e-4, rtol=1e-4), \
        float(jnp.max(jnp.abs(v - v_ref)))

    print("KERNEL_OK")
</pallas_src>

<mosaic_0001>
module attributes {stable_mosaic.version = 11 : i64} {
  func.func @value_mlp_kernel(%arg0: i32, %arg1: memref<128x16xf32, #tpu.memory_space<vmem>>, %arg2: memref<16x32xbf16, #tpu.memory_space<vmem>>, %arg3: memref<1x32xf32, #tpu.memory_space<vmem>>, %arg4: memref<32x32xbf16, #tpu.memory_space<vmem>>, %arg5: memref<1x32xf32, #tpu.memory_space<vmem>>, %arg6: memref<1x32xf32, #tpu.memory_space<vmem>>, %arg7: memref<1x1xf32, #tpu.memory_space<smem>>, %arg8: memref<1x1x128xf32, #tpu.memory_space<vmem>>) attributes {dimension_semantics = [#tpu.dimension_semantics<parallel>], iteration_bounds = array<i64: 2>, scalar_prefetch = 0 : i64, scratch_operands = 0 : i64, tpu.core_type = #tpu.core_type<tc>, window_params = [{transform_indices = @transform_0, window_bounds = array<i64: 128, 16>}, {pipeline_mode = #tpu.pipeline_mode<synchronous>, transform_indices = @transform_1, window_bounds = array<i64: 16, 32>}, {pipeline_mode = #tpu.pipeline_mode<synchronous>, transform_indices = @transform_2, window_bounds = array<i64: 1, 32>}, {pipeline_mode = #tpu.pipeline_mode<synchronous>, transform_indices = @transform_3, window_bounds = array<i64: 32, 32>}, {pipeline_mode = #tpu.pipeline_mode<synchronous>, transform_indices = @transform_4, window_bounds = array<i64: 1, 32>}, {pipeline_mode = #tpu.pipeline_mode<synchronous>, transform_indices = @transform_5, window_bounds = array<i64: 1, 32>}, {transform_indices = @transform_6, window_bounds = array<i64: 1, 1>}, {transform_indices = @transform_7, window_bounds = array<i64: 1, 1, 128>}]} {
    %c0 = arith.constant 0 : index
    %c0_0 = arith.constant 0 : index
    %0 = vector.load %arg1[%c0, %c0_0] : memref<128x16xf32, #tpu.memory_space<vmem>>, vector<128x16xf32>
    %1 = arith.truncf %0 : vector<128x16xf32> to vector<128x16xbf16>
    %c0_1 = arith.constant 0 : index
    %c0_2 = arith.constant 0 : index
    %2 = vector.load %arg2[%c0_1, %c0_2] : memref<16x32xbf16, #tpu.memory_space<vmem>>, vector<16x32xbf16>
    %cst = arith.constant dense<0.000000e+00> : vector<128x32xf32>
    %3 = tpu.matmul %1, %2, %cst {dimension_numbers = #tpu.dot_dimension_numbers<[1], [0], [0], [1], [0, 0, 1, 1], [], []>} : vector<128x16xbf16>, vector<16x32xbf16>, vector<128x32xf32> -> vector<128x32xf32>
    %c0_3 = arith.constant 0 : index
    %c0_4 = arith.constant 0 : index
    %4 = vector.load %arg3[%c0_3, %c0_4] : memref<1x32xf32, #tpu.memory_space<vmem>>, vector<1x32xf32>
    %5 = vector.broadcast %4 : vector<1x32xf32> to vector<128x32xf32>
    %6 = arith.addf %3, %5 : vector<128x32xf32>
    %cst_5 = arith.constant 0.000000e+00 : f32
    %7 = vector.broadcast %cst_5 : f32 to vector<128x32xf32>
    %8 = arith.maximumf %6, %7 : vector<128x32xf32>
    %9 = arith.truncf %8 : vector<128x32xf32> to vector<128x32xbf16>
    %c0_6 = arith.constant 0 : index
    %c0_7 = arith.constant 0 : index
    %10 = vector.load %arg4[%c0_6, %c0_7] : memref<32x32xbf16, #tpu.memory_space<vmem>>, vector<32x32xbf16>
    %cst_8 = arith.constant dense<0.000000e+00> : vector<128x32xf32>
    %11 = tpu.matmul %9, %10, %cst_8 {dimension_numbers = #tpu.dot_dimension_numbers<[1], [0], [0], [1], [0, 0, 1, 1], [], []>} : vector<128x32xbf16>, vector<32x32xbf16>, vector<128x32xf32> -> vector<128x32xf32>
    %c0_9 = arith.constant 0 : index
    %c0_10 = arith.constant 0 : index
    %12 = vector.load %arg5[%c0_9, %c0_10] : memref<1x32xf32, #tpu.memory_space<vmem>>, vector<1x32xf32>
    %13 = vector.broadcast %12 : vector<1x32xf32> to vector<128x32xf32>
    %14 = arith.addf %11, %13 : vector<128x32xf32>
    %cst_11 = arith.constant 0.000000e+00 : f32
    %15 = vector.broadcast %cst_11 : f32 to vector<128x32xf32>
    %16 = arith.maximumf %14, %15 : vector<128x32xf32>
    %c0_12 = arith.constant 0 : index
    %c0_13 = arith.constant 0 : index
    %17 = vector.load %arg6[%c0_12, %c0_13] : memref<1x32xf32, #tpu.memory_space<vmem>>, vector<1x32xf32>
    %cst_14 = arith.constant dense<0.000000e+00> : vector<1x128xf32>
    %18 = tpu.matmul %17, %16, %cst_14 {dimension_numbers = #tpu.dot_dimension_numbers<[1], [1], [0], [0], [0, 0, 1, 0], [], []>} : vector<1x32xf32>, vector<128x32xf32>, vector<1x128xf32> -> vector<1x128xf32>
    %c0_15 = arith.constant 0 : index
    %c0_16 = arith.constant 0 : index
    %19 = memref.load %arg7[%c0_15, %c0_16] : memref<1x1xf32, #tpu.memory_space<smem>>
    %20 = vector.broadcast %19 : f32 to vector<1x128xf32>
    %21 = arith.addf %18, %20 : vector<1x128xf32>
    %22 = vector.shape_cast %21 : vector<1x128xf32> to vector<1x1x128xf32>
    %c0_17 = arith.constant 0 : index
    %c0_18 = arith.constant 0 : index
    %c0_19 = arith.constant 0 : index
    %23 = vector.load %arg8[%c0_17, %c0_18, %c0_19] : memref<1x1x128xf32, #tpu.memory_space<vmem>>, vector<1x1x128xf32>
    tpu.vector_store %arg8[%c0_17, %c0_18, %c0_19], %22 {strides = array<i32>} : memref<1x1x128xf32, #tpu.memory_space<vmem>>, vector<1x1x128xf32>,
    return
  }
  func.func @transform_0(%arg0: i32) -> (i32, i32) {
    %c0_i32 = arith.constant 0 : i32
    %c0_i32_0 = arith.constant 0 : i32
    return %arg0, %c0_i32 : i32, i32
  }
  func.func @transform_1(%arg0: i32) -> (i32, i32) {
    %c0_i32 = arith.constant 0 : i32
    %c0_i32_0 = arith.constant 0 : i32
    %c0_i32_1 = arith.constant 0 : i32
    return %c0_i32, %c0_i32_0 : i32, i32
  }
  func.func @transform_2(%arg0: i32) -> (i32, i32) {
    %c0_i32 = arith.constant 0 : i32
    %c0_i32_0 = arith.constant 0 : i32
    %c0_i32_1 = arith.constant 0 : i32
    return %c0_i32, %c0_i32_0 : i32, i32
  }
  func.func @transform_3(%arg0: i32) -> (i32, i32) {
    %c0_i32 = arith.constant 0 : i32
    %c0_i32_0 = arith.constant 0 : i32
    %c0_i32_1 = arith.constant 0 : i32
    return %c0_i32, %c0_i32_0 : i32, i32
  }
  func.func @transform_4(%arg0: i32) -> (i32, i32) {
    %c0_i32 = arith.constant 0 : i32
    %c0_i32_0 = arith.constant 0 : i32
    %c0_i32_1 = arith.constant 0 : i32
    return %c0_i32, %c0_i32_0 : i32, i32
  }
  func.func @transform_5(%arg0: i32) -> (i32, i32) {
    %c0_i32 = arith.constant 0 : i32
    %c0_i32_0 = arith.constant 0 : i32
    %c0_i32_1 = arith.constant 0 : i32
    return %c0_i32, %c0_i32_0 : i32, i32
  }
  func.func @transform_6(%arg0: i32) -> (i32, i32) {
    %c0_i32 = arith.constant 0 : i32
    %c0_i32_0 = arith.constant 0 : i32
    %c0_i32_1 = arith.constant 0 : i32
    return %c0_i32, %c0_i32_0 : i32, i32
  }
  func.func @transform_7(%arg0: i32) -> (i32, i32, i32) {
    %c0_i32 = arith.constant 0 : i32
    %c0_i32_0 = arith.constant 0 : i32
    %c0_i32_1 = arith.constant 0 : i32
    return %arg0, %c0_i32, %c0_i32_0 : i32, i32, i32
  }
}

</mosaic_0001>

<llo_original>
// kernel: tpu_custom_call.1
$region0: #{tpu_custom_call.1}
  #allocation0 [shape = 'u32[]', space=smem, size = 0x4, offset = 0x4, fixed_abs, tag = 'smem constant byte address 0x4 - core index']
  #allocation1 [shape = 'u32[144,128]{1,0:T(1,128)}', space=vmem, size = 0x12000, scoped, tag = 'internal scratch']
  #allocation2 [shape = 'f32[1,1]{1,0:T(1,128)S(6)}', space=smem, size = 0x200, scoped, tag = 'scoped memory for tpu_custom_call.1']
  %s0 = inlined_call_operand.vmem [shape: f32[256,16], index: 0, kind: input, shape index: {}]
  %s1 = inlined_call_operand.vmem [shape: bf16[16,32], index: 1, kind: input, shape index: {}]
  %s2 = inlined_call_operand.vmem [shape: f32[1,32], index: 2, kind: input, shape index: {}]
  %s3 = inlined_call_operand.vmem [shape: bf16[32,32], index: 3, kind: input, shape index: {}]
  %s4 = inlined_call_operand.vmem [shape: f32[1,32], index: 4, kind: input, shape index: {}]
  %s5 = inlined_call_operand.vmem [shape: f32[1,32], index: 5, kind: input, shape index: {}]
  %s6 = inlined_call_operand.<no memory space> [shape: f32[1,1], index: 6, kind: input, shape index: {}]
  %s7 = inlined_call_operand.hbm [shape: f32[2,1,128], index: 7, kind: output, shape index: {}]
  %s8 = sld [smem:[#allocation0]]
  $region61: #{tpu_custom_call.1} parent=0
    _
  %s10 = ssub.s32 1, %s8
  %s11 = scalar_select 0, %s10, %s8
  %12 = sst [smem:[#allocation2]] %s6
  $region1: #{tpu_custom_call.1} parent=0
    #allocation3 [shape = 'u8[1024]{0}', space=vmem, size = 0x400, scoped, tag = 'output window, operand 0']
    #allocation4 [shape = 's32[2]{0}', space=sflag, size = 0x8, scoped, tag = 'scoped memory for tpu_custom_call.1']
    %13 = vsyncpa [#allocation4], 0
    %s14 = scalar_lea.sflag [#allocation4], 1
    %15 = vsyncpa %s14, 0
    loop: start=0, step=1, limit=4
    $region2: #{tpu_custom_call.1} parent=1 // loop_pre_header
      _
    $region3: #{tpu_custom_call.1} parent=1 // loop_header
      %s17 = sphi 0, %s21
      %p18 = scmp.ge.s32.totalorder %s17, 4
      %s27 = sphi 0, %s29
      %s30 = sphi 0, %s27
      %s31 = sphi 0, %s30
      %s47 = sphi 0, %s31
      %s51 = sphi 0, %s51
      %s53 = sphi 0, %s51
      %s54 = sphi 0, %s53
      %s68 = sphi 0, %s54
      %s72 = sphi 0, %s72
      %s74 = sphi 0, %s72
      %s75 = sphi 0, %s74
      %s89 = sphi 0, %s75
      %s93 = sphi 0, %s93
      %s95 = sphi 0, %s93
      %s96 = sphi 0, %s95
      %s110 = sphi 0, %s96
      %s114 = sphi 0, %s114
      %s116 = sphi 0, %s114
      %s117 = sphi 0, %s116
      %s131 = sphi 0, %s117
      %s135 = sphi 0, %s135
      %s137 = sphi 0, %s135
      %s138 = sphi 0, %s137
      %s152 = sphi 0, %s138
      %s156 = sphi 0, %s156
      %s158 = sphi 0, %s156
      %s159 = sphi 0, %s158
      %s173 = sphi 0, %s159
      %s179 = sphi 0, %s181
      %s182 = sphi 0, %s179
      %s183 = sphi 0, %s182
      %s199 = sphi 0, %s183
    $region4: #{tpu_custom_call.1} parent=1 // loop_header_branch
      %20 = sbr.rel (%p18) target = $region8
    $region5: #{tpu_custom_call.1} parent=1 // loop_body
      %s22 = ssub.s32 %s17, 1
      %s23 = ssub.s32 %s17, 2
      %s24 = sadd.s32 %s17, 1
      %s25 = ssub.s32 %s17, %s24
      %p26 = scmp.eq.s32.totalorder %s25, 0
      %s28 = sadd.s32 %s27, 1
      %s29 = scalar_select %p26, %s27, %s28
      %p32 = pneg %p26
      %p33 = scmp.eq.s32.totalorder %s17, 1
      %p34 = por %p32, %p33
      %p35 = scmp.ne.s32.totalorder %s27, %s30
      %p36 = scmp.eq.s32.totalorder %s17, 0
      %p37 = por %p35, %p36
      %p38 = scmp.ne.s32.totalorder %s27, %s30
      %p39 = scmp.eq.s32.totalorder %s22, 1
      %p40 = por %p38, %p39
      %p41 = scmp.ne.s32.totalorder %s30, %s31
      %p42 = scmp.eq.s32.totalorder %s22, 0
      %p43 = por %p41, %p42
      %p44 = scmp.ne.s32.totalorder %s30, %s31
      %p45 = scmp.eq.s32.totalorder %s23, 1
      %p46 = por %p44, %p45
      %p48 = scmp.ne.s32.totalorder %s31, %s47
      %p49 = scmp.eq.s32.totalorder %s23, 0
      %p50 = por %p48, %p49
      %s52 = sadd.s32 %s51, 1
      %p55 = scmp.eq.s32.totalorder %s17, 1
      %p56 = scmp.ne.s32.totalorder %s51, %s53
      %p57 = scmp.eq.s32.totalorder %s17, 0
      %p58 = por %p56, %p57
      %p59 = scmp.ne.s32.totalorder %s51, %s53
      %p60 = scmp.eq.s32.totalorder %s22, 1
      %p61 = por %p59, %p60
      %p62 = scmp.ne.s32.totalorder %s53, %s54
      %p63 = scmp.eq.s32.totalorder %s22, 0
      %p64 = por %p62, %p63
      %p65 = scmp.ne.s32.totalorder %s53, %s54
      %p66 = scmp.eq.s32.totalorder %s23, 1
      %p67 = por %p65, %p66
      %p69 = scmp.ne.s32.totalorder %s54, %s68
      %p70 = scmp.eq.s32.totalorder %s23, 0
      %p71 = por %p69, %p70
      %s73 = sadd.s32 %s72, 1
      %p76 = scmp.eq.s32.totalorder %s17, 1
      %p77 = scmp.ne.s32.totalorder %s72, %s74
      %p78 = scmp.eq.s32.totalorder %s17, 0
      %p79 = por %p77, %p78
      %p80 = scmp.ne.s32.totalorder %s72, %s74
      %p81 = scmp.eq.s32.totalorder %s22, 1
      %p82 = por %p80, %p81
      %p83 = scmp.ne.s32.totalorder %s74, %s75
      %p84 = scmp.eq.s32.totalorder %s22, 0
      %p85 = por %p83, %p84
      %p86 = scmp.ne.s32.totalorder %s74, %s75
      %p87 = scmp.eq.s32.totalorder %s23, 1
      %p88 = por %p86, %p87
      %p90 = scmp.ne.s32.totalorder %s75, %s89
      %p91 = scmp.eq.s32.totalorder %s23, 0
      %p92 = por %p90, %p91
      %s94 = sadd.s32 %s93, 1
      %p97 = scmp.eq.s32.totalorder %s17, 1
      %p98 = scmp.ne.s32.totalorder %s93, %s95
      %p99 = scmp.eq.s32.totalorder %s17, 0
      %p100 = por %p98, %p99
      %p101 = scmp.ne.s32.totalorder %s93, %s95
      %p102 = scmp.eq.s32.totalorder %s22, 1
      %p103 = por %p101, %p102
      %p104 = scmp.ne.s32.totalorder %s95, %s96
      %p105 = scmp.eq.s32.totalorder %s22, 0
      %p106 = por %p104, %p105
      %p107 = scmp.ne.s32.totalorder %s95, %s96
      %p108 = scmp.eq.s32.totalorder %s23, 1
      %p109 = por %p107, %p108
      %p111 = scmp.ne.s32.totalorder %s96, %s110
      %p112 = scmp.eq.s32.totalorder %s23, 0
      %p113 = por %p111, %p112
      %s115 = sadd.s32 %s114, 1
      %p118 = scmp.eq.s32.totalorder %s17, 1
      %p119 = scmp.ne.s32.totalorder %s114, %s116
      %p120 = scmp.eq.s32.totalorder %s17, 0
      %p121 = por %p119, %p120
      %p122 = scmp.ne.s32.totalorder %s114, %s116
      %p123 = scmp.eq.s32.totalorder %s22, 1
      %p124 = por %p122, %p123
      %p125 = scmp.ne.s32.totalorder %s116, %s117
      %p126 = scmp.eq.s32.totalorder %s22, 0
      %p127 = por %p125, %p126
      %p128 = scmp.ne.s32.totalorder %s116, %s117
      %p129 = scmp.eq.s32.totalorder %s23, 1
      %p130 = por %p128, %p129
      %p132 = scmp.ne.s32.totalorder %s117, %s131
      %p133 = scmp.eq.s32.totalorder %s23, 0
      %p134 = por %p132, %p133
      %s136 = sadd.s32 %s135, 1
      %p139 = scmp.eq.s32.totalorder %s17, 1
      %p140 = scmp.ne.s32.totalorder %s135, %s137
      %p141 = scmp.eq.s32.totalorder %s17, 0
      %p142 = por %p140, %p141
      %p143 = scmp.ne.s32.totalorder %s135, %s137
      %p144 = scmp.eq.s32.totalorder %s22, 1
      %p145 = por %p143, %p144
      %p146 = scmp.ne.s32.totalorder %s137, %s138
      %p147 = scmp.eq.s32.totalorder %s22, 0
      %p148 = por %p146, %p147
      %p149 = scmp.ne.s32.totalorder %s137, %s138
      %p150 = scmp.eq.s32.totalorder %s23, 1
      %p151 = por %p149, %p150
      %p153 = scmp.ne.s32.totalorder %s138, %s152
      %p154 = scmp.eq.s32.totalorder %s23, 0
      %p155 = por %p153, %p154
      %s157 = sadd.s32 %s156, 1
      %p160 = scmp.eq.s32.totalorder %s17, 1
      %p161 = scmp.ne.s32.totalorder %s156, %s158
      %p162 = scmp.eq.s32.totalorder %s17, 0
      %p163 = por %p161, %p162
      %p164 = scmp.ne.s32.totalorder %s156, %s158
      %p165 = scmp.eq.s32.totalorder %s22, 1
      %p166 = por %p164, %p165
      %p167 = scmp.ne.s32.totalorder %s158, %s159
      %p168 = scmp.eq.s32.totalorder %s22, 0
      %p169 = por %p167, %p168
      %p170 = scmp.ne.s32.totalorder %s158, %s159
      %p171 = scmp.eq.s32.totalorder %s23, 1
      %p172 = por %p170, %p171
      %p174 = scmp.ne.s32.totalorder %s159, %s173
      %p175 = scmp.eq.s32.totalorder %s23, 0
      %p176 = por %p174, %p175
      %s177 = ssub.s32 %s17, %s24
      %p178 = scmp.eq.s32.totalorder %s177, 0
      %s180 = sadd.s32 %s179, 1
      %s181 = scalar_select %p178, %s179, %s180
      %p184 = pneg %p178
      %p185 = scmp.eq.s32.totalorder %s17, 1
      %p186 = por %p184, %p185
      %p187 = scmp.ne.s32.totalorder %s179, %s182
      %p188 = scmp.eq.s32.totalorder %s17, 0
      %p189 = por %p187, %p188
      %p190 = scmp.ne.s32.totalorder %s179, %s182
      %p191 = scmp.eq.s32.totalorder %s22, 1
      %p192 = por %p190, %p191
      %p193 = scmp.ne.s32.totalorder %s182, %s183
      %p194 = scmp.eq.s32.totalorder %s22, 0
      %p195 = por %p193, %p194
      %p196 = scmp.ne.s32.totalorder %s182, %s183
      %p197 = scmp.eq.s32.totalorder %s23, 1
      %p198 = por %p196, %p197
      %p200 = scmp.ne.s32.totalorder %s183, %s199
      %p201 = scmp.eq.s32.totalorder %s23, 0
      %p202 = por %p200, %p201
      %p203 = scmp.le.s32.totalorder 1, %s17
      %p204 = scmp.lt.s32.totalorder %s17, 3
      %p205 = pnand %p203, %p204
      %p206 = pneg %p205
      // Predicated region
      $region9: #{tpu_custom_call.1} parent=5 // pred_check
        _
      $region10: #{tpu_custom_call.1} parent=5 // pred_check_branch
        %208 = sbr.rel (%p205) target = $region12
      $region11: #{tpu_custom_call.1} parent=5 // pred_region
        %s209 = ssub.s32 %s17, 1
        // Predicated region
        $region13: #{tpu_custom_call.1} parent=11 // pred_check
          %p210 = pneg %p64
        $region14: #{tpu_custom_call.1} parent=11 // pred_check_branch
          %212 = sbr.rel (%p210) target = $region16
        $region15: #{tpu_custom_call.1} parent=11 // pred_region
          _
        $region16: #{tpu_custom_call.1} parent=11 // pred_fallthru
          _
        // Predicated region
        $region17: #{tpu_custom_call.1} parent=11 // pred_check
          %p213 = pneg %p85
        $region18: #{tpu_custom_call.1} parent=11 // pred_check_branch
          %215 = sbr.rel (%p213) target = $region20
        $region19: #{tpu_custom_call.1} parent=11 // pred_region
          _
        $region20: #{tpu_custom_call.1} parent=11 // pred_fallthru
          _
        // Predicated region
        $region21: #{tpu_custom_call.1} parent=11 // pred_check
          %p216 = pneg %p106
        $region22: #{tpu_custom_call.1} parent=11 // pred_check_branch
          %218 = sbr.rel (%p216) target = $region24
        $region23: #{tpu_custom_call.1} parent=11 // pred_region
          _
        $region24: #{tpu_custom_call.1} parent=11 // pred_fallthru
          _
        // Predicated region
        $region25: #{tpu_custom_call.1} parent=11 // pred_check
          %p219 = pneg %p127
        $region26: #{tpu_custom_call.1} parent=11 // pred_check_branch
          %221 = sbr.rel (%p219) target = $region28
        $region27: #{tpu_custom_call.1} parent=11 // pred_region
          _
        $region28: #{tpu_custom_call.1} parent=11 // pred_fallthru
          _
        // Predicated region
        $region29: #{tpu_custom_call.1} parent=11 // pred_check
          %p222 = pneg %p148
        $region30: #{tpu_custom_call.1} parent=11 // pred_check_branch
          %224 = sbr.rel (%p222) target = $region32
        $region31: #{tpu_custom_call.1} parent=11 // pred_region
          _
        $region32: #{tpu_custom_call.1} parent=11 // pred_fallthru
          _
        // Predicated region
        $region33: #{tpu_custom_call.1} parent=11 // pred_check
          %p225 = pneg %p169
        $region34: #{tpu_custom_call.1} parent=11 // pred_check_branch
          %227 = sbr.rel (%p225) target = $region36
        $region35: #{tpu_custom_call.1} parent=11 // pred_region
          _
        $region36: #{tpu_custom_call.1} parent=11 // pred_fallthru
          _
      $region12: #{tpu_custom_call.1} parent=5 // pred_fallthru
        _
      %p228 = scmp.lt.s32.totalorder %s17, 2
      // Predicated region
      $region37: #{tpu_custom_call.1} parent=5 // pred_check
        %p229 = pneg %p228
      $region38: #{tpu_custom_call.1} parent=5 // pred_check_branch
        %231 = sbr.rel (%p229) target = $region40
      $region39: #{tpu_custom_call.1} parent=5 // pred_region
        // Predicated region
        $region41: #{tpu_custom_call.1} parent=39 // pred_check
          %p232 = pneg %p37
        $region42: #{tpu_custom_call.1} parent=39 // pred_check_branch
          %234 = sbr.rel (%p232) target = $region44
        $region43: #{tpu_custom_call.1} parent=39 // pred_region
          %s235 = smul.u32 16, %s17
          %p236 = scmp.lt.s32.totalorder %s235, 31
          %s237 = scalar_select %p236, %s235, 31
          %s238 = smul.addr %s237, 8
          %s239 = scalar_lea.vmem %s0, %s238
          %s240 = smul.u32 16, %s17
        $region44: #{tpu_custom_call.1} parent=39 // pred_fallthru
          _
      $region40: #{tpu_custom_call.1} parent=5 // pred_fallthru
        _
      %p241 = scmp.le.s32.totalorder 1, %s17
      %p242 = scmp.lt.s32.totalorder %s17, 3
      %p243 = pnand %p241, %p242
      %p244 = pneg %p243
      // Predicated region
      $region45: #{tpu_custom_call.1} parent=5 // pred_check
        _
      $region46: #{tpu_custom_call.1} parent=5 // pred_check_branch
        %246 = sbr.rel (%p243) target = $region48
      $region47: #{tpu_custom_call.1} parent=5 // pred_region
        %s247 = ssub.s32 %s17, 1
        %s248 = smul.u32 16, %s22
        %p249 = scmp.lt.s32.totalorder %s248, 31
        %s250 = scalar_select %p249, %s248, 31
        %s251 = smul.addr %s250, 8
        %s252 = scalar_lea.vmem %s0, %s251
        %p253 = pneg %p43
        %p254 = pneg %p40
        %p255 = pneg %p64
        %p256 = pneg %p61
        %p257 = pneg %p85
        %p258 = pneg %p82
        %p259 = pneg %p106
        %p260 = pneg %p103
        %p261 = pneg %p127
        %p262 = pneg %p124
        %p263 = pneg %p148
        %p264 = pneg %p145
        %p265 = pneg %p169
        %p266 = pneg %p166
        %p267 = pneg %p195
        %p268 = pneg %p192
        %s269 = sand.u32 %s182, 1
        %s270 = scalar_lea.sflag [#allocation4], %s269
        %s271 = sand.u32 %s182, 1
        %s272 = scalar_lea.vmem [#allocation3], %s271
        %s273 = smul.u32 16, %s22
        %p274 = scmp.lt.s32.totalorder %s273, 31
        %s275 = scalar_select %p274, %s273, 31
        %s276 = smul.addr %s275, 8
        %s277 = scalar_lea.vmem %s0, %s276
        %s278 = smul.u32 16, %s22
        %v280 = vld [vmem:[%s277] sm:$0xff]
        %v281 = vld [vmem:[%s277 + $0x8] sm:$0xff]
        %v282 = vld [vmem:[%s277 + $0x10] sm:$0xff]
        %v283 = vld [vmem:[%s277 + $0x18] sm:$0xff]
        %v284 = vld [vmem:[%s277 + $0x20] sm:$0xff]
        %v285 = vld [vmem:[%s277 + $0x28] sm:$0xff]
        %v286 = vld [vmem:[%s277 + $0x30] sm:$0xff]
        %v287 = vld [vmem:[%s277 + $0x38] sm:$0xff]
        %v288 = vld [vmem:[%s277 + $0x40] sm:$0xff]
        %v289 = vld [vmem:[%s277 + $0x48] sm:$0xff]
        %v290 = vld [vmem:[%s277 + $0x50] sm:$0xff]
        %v291 = vld [vmem:[%s277 + $0x58] sm:$0xff]
        %v292 = vld [vmem:[%s277 + $0x60] sm:$0xff]
        %v293 = vld [vmem:[%s277 + $0x68] sm:$0xff]
        %v294 = vld [vmem:[%s277 + $0x70] sm:$0xff]
        %v295 = vld [vmem:[%s277 + $0x78] sm:$0xff]
        %v296 = vpack.c.bf16 %v281, %v280
        %v297 = vpack.c.bf16 %v283, %v282
        %v298 = vpack.c.bf16 %v285, %v284
        %v299 = vpack.c.bf16 %v287, %v286
        %v300 = vpack.c.bf16 %v289, %v288
        %v301 = vpack.c.bf16 %v291, %v290
        %v302 = vpack.c.bf16 %v293, %v292
        %v303 = vpack.c.bf16 %v295, %v294
        %v304 = vld [vmem:[%s1] sm:$0xf]
        %v305 = vld [vmem:[%s1 + $0x4] sm:$0xf]
        %v306 = vld [vmem:[%s2] sm:$0x1]
        %v308 = vlaneseq
        %v309 = vshrl.u32 %v308, 7
        %v310 = vsub.s32 0, %v309
        %v311 = vrot.slane %v306, %v310
        %v315 = vunpack.c.l.b16 %v304
        %v316 = vunpack.c.l.b16 %v305
        %v317 = vpack.c.b16 %v316, %v315
        %vm319 = vcmask 130048
        %v321 = vsel %vm319, %v296, 0
        %v324 = vsel %vm319, %v297, 0
        %v327 = vsel %vm319, %v298, 0
        %v330 = vsel %vm319, %v299, 0
        %v333 = vsel %vm319, %v300, 0
        %v336 = vsel %vm319, %v301, 0
        %v339 = vsel %vm319, %v302, 0
        %v342 = vsel %vm319, %v303, 0
        %344 = vmatprep.subr.bf16.mxu0 0
        %345 = vmatpush1.bf16.msra.mxu0 %v317
        %346 = vmatprep.subr.bf16.mxu0 0
        %347 = vmatpush1.bf16.msra.mxu0 0
        %348 = vmatprep.subr.bf16.mxu0 0
        %349 = vmatpush1.bf16.msra.mxu0 0
        %350 = vmatprep.subr.bf16.mxu0 0
        %351 = vmatpush1.bf16.msra.mxu0 0
        %352 = vmatprep.subr.bf16.mxu0 0
        %353 = vmatpush1.bf16.msra.mxu0 0
        %354 = vmatprep.subr.bf16.mxu0 0
        %355 = vmatpush1.bf16.msra.mxu0 0
        %356 = vmatprep.subr.bf16.mxu0 0
        %357 = vmatpush1.bf16.msra.mxu0 0
        %358 = vmatprep.subr.bf16.mxu0 0
        %359 = vmatpush1.bf16.msra.mxu0 0
        %360 = vmatprep.subr.bf16.mxu0 0
        %361 = vmatpush1.bf16.msra.mxu0 0
        %362 = vmatprep.subr.bf16.mxu0 0
        %363 = vmatpush1.bf16.msra.mxu0 0
        %364 = vmatprep.subr.bf16.mxu0 0
        %365 = vmatpush1.bf16.msra.mxu0 0
        %366 = vmatprep.subr.bf16.mxu0 0
        %367 = vmatpush1.bf16.msra.mxu0 0
        %368 = vmatprep.subr.bf16.mxu0 0
        %369 = vmatpush1.bf16.msra.mxu0 0
        %370 = vmatprep.subr.bf16.mxu0 0
        %371 = vmatpush1.bf16.msra.mxu0 0
        %372 = vmatprep.subr.bf16.mxu0 0
        %373 = vmatpush1.bf16.msra.mxu0 0
        %374 = vmatprep.subr.bf16.mxu0 0
        %375 = vmatpush1.bf16.msra.mxu0 0
        %376 = vmatprep.mubr.bf16.mxu0 0
        %377 = vmatmul.mubr.bf16.gmra.mrb[0].mxu0 %v321
        %v378 = vpop.f32.mrb[0].mxu0
        %v379 = vadd.f32 %v311, %v378
        %v380 = vpop.f32.mrb[0].mxu0
        %v381 = vpop.f32.mrb[0].mxu0
        %v382 = vadd.f32 %v311, %v381
        %v383 = vpop.f32.mrb[0].mxu0
        %384 = vmatprep.mubr.bf16.mxu0 0
        %385 = vmatmul.mubr.bf16.gmra.mrb[0].mxu0 %v324
        %v386 = vpop.f32.mrb[0].mxu0
        %v387 = vadd.f32 %v311, %v386
        %v388 = vpop.f32.mrb[0].mxu0
        %v389 = vpop.f32.mrb[0].mxu0
        %v390 = vadd.f32 %v311, %v389
        %v391 = vpop.f32.mrb[0].mxu0
        %392 = vmatprep.mubr.bf16.mxu0 0
        %393 = vmatmul.mubr.bf16.gmra.mrb[0].mxu0 %v327
        %v394 = vpop.f32.mrb[0].mxu0
        %v395 = vadd.f32 %v311, %v394
        %v396 = vpop.f32.mrb[0].mxu0
        %v397 = vpop.f32.mrb[0].mxu0
        %v398 = vadd.f32 %v311, %v397
        %v399 = vpop.f32.mrb[0].mxu0
        %400 = vmatprep.mubr.bf16.mxu0 0
        %401 = vmatmul.mubr.bf16.gmra.mrb[0].mxu0 %v330
        %v402 = vpop.f32.mrb[0].mxu0
        %v403 = vadd.f32 %v311, %v402
        %v404 = vpop.f32.mrb[0].mxu0
        %v405 = vpop.f32.mrb[0].mxu0
        %v406 = vadd.f32 %v311, %v405
        %v407 = vpop.f32.mrb[0].mxu0
        %408 = vmatprep.mubr.bf16.mxu0 0
        %409 = vmatmul.mubr.bf16.gmra.mrb[0].mxu0 %v333
        %v410 = vpop.f32.mrb[0].mxu0
        %v411 = vadd.f32 %v311, %v410
        %v412 = vpop.f32.mrb[0].mxu0
        %v413 = vpop.f32.mrb[0].mxu0
        %v414 = vadd.f32 %v311, %v413
        %v415 = vpop.f32.mrb[0].mxu0
        %416 = vmatprep.mubr.bf16.mxu0 0
        %417 = vmatmul.mubr.bf16.gmra.mrb[0].mxu0 %v336
        %v418 = vpop.f32.mrb[0].mxu0
        %v419 = vadd.f32 %v311, %v418
        %v420 = vpop.f32.mrb[0].mxu0
        %v421 = vpop.f32.mrb[0].mxu0
        %v422 = vadd.f32 %v311, %v421
        %v423 = vpop.f32.mrb[0].mxu0
        %424 = vmatprep.mubr.bf16.mxu0 0
        %425 = vmatmul.mubr.bf16.gmra.mrb[0].mxu0 %v339
        %v426 = vpop.f32.mrb[0].mxu0
        %v427 = vadd.f32 %v311, %v426
        %v428 = vpop.f32.mrb[0].mxu0
        %v429 = vpop.f32.mrb[0].mxu0
        %v430 = vadd.f32 %v311, %v429
        %v431 = vpop.f32.mrb[0].mxu0
        %432 = vmatprep.mubr.bf16.mxu0 0
        %433 = vmatmul.mubr.bf16.gmra.mrb[0].mxu0 %v342
        %v434 = vpop.f32.mrb[0].mxu0
        %v435 = vadd.f32 %v311, %v434
        %v436 = vpop.f32.mrb[0].mxu0
        %v437 = vpop.f32.mrb[0].mxu0
        %v438 = vadd.f32 %v311, %v437
        %v439 = vpop.f32.mrb[0].mxu0
        %440 = vdwg.mxu0
        %v441 = vmax.f32 %v379, 0.0
        %v442 = vmax.f32 %v382, 0.0
        %v443 = vmax.f32 %v387, 0.0
        %v444 = vmax.f32 %v390, 0.0
        %v445 = vmax.f32 %v395, 0.0
        %v446 = vmax.f32 %v398, 0.0
        %v447 = vmax.f32 %v403, 0.0
        %v448 = vmax.f32 %v406, 0.0
        %v449 = vmax.f32 %v411, 0.0
        %v450 = vmax.f32 %v414, 0.0
        %v451 = vmax.f32 %v419, 0.0
        %v452 = vmax.f32 %v422, 0.0
        %v453 = vmax.f32 %v427, 0.0
        %v454 = vmax.f32 %v430, 0.0
        %v455 = vmax.f32 %v435, 0.0
        %v456 = vmax.f32 %v438, 0.0
        %v457 = vpack.c.bf16 %v442, %v441
        %v458 = vpack.c.bf16 %v444, %v443
        %v459 = vpack.c.bf16 %v446, %v445
        %v460 = vpack.c.bf16 %v448, %v447
        %v461 = vpack.c.bf16 %v450, %v449
        %v462 = vpack.c.bf16 %v452, %v451
        %v463 = vpack.c.bf16 %v454, %v453
        %v464 = vpack.c.bf16 %v456, %v455
        %v465 = vld [vmem:[%s3] sm:$0xf]
        %v466 = vld [vmem:[%s3 + $0x4] sm:$0xf]
        %v467 = vld [vmem:[%s3 + $0x8] sm:$0xf]
        %v468 = vld [vmem:[%s3 + $0xc] sm:$0xf]
        %v469 = vld [vmem:[%s4] sm:$0x1]
        %v471 = vlaneseq
        %v472 = vshrl.u32 %v471, 7
        %v473 = vsub.s32 0, %v472
        %v474 = vrot.slane %v469, %v473
        %v480 = vunpack.c.l.b16 %v465
        %v481 = vunpack.c.l.b16 %v466
        %v482 = vunpack.c.l.b16 %v467
        %v483 = vunpack.c.l.b16 %v468
        %v484 = vpack.c.b16 %v481, %v480
        %v485 = vpack.c.b16 %v483, %v482
        %vm488 = vcmask 261120
        %v490 = vsel %vm488, %v457, 0
        %v493 = vsel %vm488, %v458, 0
        %v496 = vsel %vm488, %v459, 0
        %v499 = vsel %vm488, %v460, 0
        %v502 = vsel %vm488, %v461, 0
        %v505 = vsel %vm488, %v462, 0
        %v508 = vsel %vm488, %v463, 0
        %v511 = vsel %vm488, %v464, 0
        %513 = vmatprep.subr.bf16.mxu0 0
        %514 = vmatpush1.bf16.msra.mxu0 %v484
        %515 = vmatprep.subr.bf16.mxu0 0
        %516 = vmatpush1.bf16.msra.mxu0 %v485
        %517 = vmatprep.subr.bf16.mxu0 0
        %518 = vmatpush1.bf16.msra.mxu0 0
        %519 = vmatprep.subr.bf16.mxu0 0
        %520 = vmatpush1.bf16.msra.mxu0 0
        %521 = vmatprep.subr.bf16.mxu0 0
        %522 = vmatpush1.bf16.msra.mxu0 0
        %523 = vmatprep.subr.bf16.mxu0 0
        %524 = vmatpush1.bf16.msra.mxu0 0
        %525 = vmatprep.subr.bf16.mxu0 0
        %526 = vmatpush1.bf16.msra.mxu0 0
        %527 = vmatprep.subr.bf16.mxu0 0
        %528 = vmatpush1.bf16.msra.mxu0 0
        %529 = vmatprep.subr.bf16.mxu0 0
        %530 = vmatpush1.bf16.msra.mxu0 0
        %531 = vmatprep.subr.bf16.mxu0 0
        %532 = vmatpush1.bf16.msra.mxu0 0
        %533 = vmatprep.subr.bf16.mxu0 0
        %534 = vmatpush1.bf16.msra.mxu0 0
        %535 = vmatprep.subr.bf16.mxu0 0
        %536 = vmatpush1.bf16.msra.mxu0 0
        %537 = vmatprep.subr.bf16.mxu0 0
        %538 = vmatpush1.bf16.msra.mxu0 0
        %539 = vmatprep.subr.bf16.mxu0 0
        %540 = vmatpush1.bf16.msra.mxu0 0
        %541 = vmatprep.subr.bf16.mxu0 0
        %542 = vmatpush1.bf16.msra.mxu0 0
        %543 = vmatprep.subr.bf16.mxu0 0
        %544 = vmatpush1.bf16.msra.mxu0 0
        %545 = vmatprep.mubr.bf16.mxu0 0
        %546 = vmatmul.mubr.bf16.gmra.mrb[0].mxu0 %v490
        %v547 = vpop.f32.mrb[0].mxu0
        %v548 = vadd.f32 %v474, %v547
        %v549 = vpop.f32.mrb[0].mxu0
        %v550 = vpop.f32.mrb[0].mxu0
        %v551 = vadd.f32 %v474, %v550
        %v552 = vpop.f32.mrb[0].mxu0
        %553 = vmatprep.mubr.bf16.mxu0 0
        %554 = vmatmul.mubr.bf16.gmra.mrb[0].mxu0 %v493
        %v555 = vpop.f32.mrb[0].mxu0
        %v556 = vadd.f32 %v474, %v555
        %v557 = vpop.f32.mrb[0].mxu0
        %v558 = vpop.f32.mrb[0].mxu0
        %v559 = vadd.f32 %v474, %v558
        %v560 = vpop.f32.mrb[0].mxu0
        %561 = vmatprep.mubr.bf16.mxu0 0
        %562 = vmatmul.mubr.bf16.gmra.mrb[0].mxu0 %v496
        %v563 = vpop.f32.mrb[0].mxu0
        %v564 = vadd.f32 %v474, %v563
        %v565 = vpop.f32.mrb[0].mxu0
        %v566 = vpop.f32.mrb[0].mxu0
        %v567 = vadd.f32 %v474, %v566
        %v568 = vpop.f32.mrb[0].mxu0
        %569 = vmatprep.mubr.bf16.mxu0 0
        %570 = vmatmul.mubr.bf16.gmra.mrb[0].mxu0 %v499
        %v571 = vpop.f32.mrb[0].mxu0
        %v572 = vadd.f32 %v474, %v571
        %v573 = vpop.f32.mrb[0].mxu0
        %v574 = vpop.f32.mrb[0].mxu0
        %v575 = vadd.f32 %v474, %v574
        %v576 = vpop.f32.mrb[0].mxu0
        %577 = vmatprep.mubr.bf16.mxu0 0
        %578 = vmatmul.mubr.bf16.gmra.mrb[0].mxu0 %v502
        %v579 = vpop.f32.mrb[0].mxu0
        %v580 = vadd.f32 %v474, %v579
        %v581 = vpop.f32.mrb[0].mxu0
        %v582 = vpop.f32.mrb[0].mxu0
        %v583 = vadd.f32 %v474, %v582
        %v584 = vpop.f32.mrb[0].mxu0
        %585 = vmatprep.mubr.bf16.mxu0 0
        %586 = vmatmul.mubr.bf16.gmra.mrb[0].mxu0 %v505
        %v587 = vpop.f32.mrb[0].mxu0
        %v588 = vadd.f32 %v474, %v587
        %v589 = vpop.f32.mrb[0].mxu0
        %v590 = vpop.f32.mrb[0].mxu0
        %v591 = vadd.f32 %v474, %v590
        %v592 = vpop.f32.mrb[0].mxu0
        %593 = vmatprep.mubr.bf16.mxu0 0
        %594 = vmatmul.mubr.bf16.gmra.mrb[0].mxu0 %v508
        %v595 = vpop.f32.mrb[0].mxu0
        %v596 = vadd.f32 %v474, %v595
        %v597 = vpop.f32.mrb[0].mxu0
        %v598 = vpop.f32.mrb[0].mxu0
        %v599 = vadd.f32 %v474, %v598
        %v600 = vpop.f32.mrb[0].mxu0
        %601 = vmatprep.mubr.bf16.mxu0 0
        %602 = vmatmul.mubr.bf16.gmra.mrb[0].mxu0 %v511
        %v603 = vpop.f32.mrb[0].mxu0
        %v604 = vadd.f32 %v474, %v603
        %v605 = vpop.f32.mrb[0].mxu0
        %v606 = vpop.f32.mrb[0].mxu0
        %v607 = vadd.f32 %v474, %v606
        %v608 = vpop.f32.mrb[0].mxu0
        %609 = vdwg.mxu0
        %v610 = vmax.f32 %v548, 0.0
        %v611 = vmax.f32 %v551, 0.0
        %v612 = vmax.f32 %v556, 0.0
        %v613 = vmax.f32 %v559, 0.0
        %v614 = vmax.f32 %v564, 0.0
        %v615 = vmax.f32 %v567, 0.0
        %v616 = vmax.f32 %v572, 0.0
        %v617 = vmax.f32 %v575, 0.0
        %v618 = vmax.f32 %v580, 0.0
        %v619 = vmax.f32 %v583, 0.0
        %v620 = vmax.f32 %v588, 0.0
        %v621 = vmax.f32 %v591, 0.0
        %v622 = vmax.f32 %v596, 0.0
        %v623 = vmax.f32 %v599, 0.0
        %v624 = vmax.f32 %v604, 0.0
        %v625 = vmax.f32 %v607, 0.0
        %v626 = vld [vmem:[%s5] sm:$0x1]
        %s627 = sld [smem:[#allocation2]]
        %v628 = vstv %s627
        %v630 = vsel %vm488, %v626, 0
        %v633 = vsel %vm488, %v610, 0
        %v636 = vsel %vm488, %v611, 0
        %v639 = vsel %vm488, %v612, 0
        %v642 = vsel %vm488, %v613, 0
        %v645 = vsel %vm488, %v614, 0
        %v648 = vsel %vm488, %v615, 0
        %v651 = vsel %vm488, %v616, 0
        %v654 = vsel %vm488, %v617, 0
        %v657 = vsel %vm488, %v618, 0
        %v660 = vsel %vm488, %v619, 0
        %v663 = vsel %vm488, %v620, 0
        %v666 = vsel %vm488, %v621, 0
        %v669 = vsel %vm488, %v622, 0
        %v672 = vsel %vm488, %v623, 0
        %v675 = vsel %vm488, %v624, 0
        %v678 = vsel %vm488, %v625, 0
        %680 = vmatprep.subr.mxu0 0.0
        %681 = vmatpush1.xpose.msra.mxu0 %v633
        %682 = vmatprep.subr.mxu0 0.0
        %683 = vmatpush1.xpose.msra.mxu0 %v636
        %684 = vmatprep.subr.mxu0 0.0
        %685 = vmatpush1.xpose.msra.mxu0 %v639
        %686 = vmatprep.subr.mxu0 0.0
        %687 = vmatpush1.xpose.msra.mxu0 %v642
        %688 = vmatprep.subr.mxu0 0.0
        %689 = vmatpush1.xpose.msra.mxu0 %v645
        %690 = vmatprep.subr.mxu0 0.0
        %691 = vmatpush1.xpose.msra.mxu0 %v648
        %692 = vmatprep.subr.mxu0 0.0
        %693 = vmatpush1.xpose.msra.mxu0 %v651
        %694 = vmatprep.subr.mxu0 0.0
        %695 = vmatpush1.xpose.msra.mxu0 %v654
        %696 = vmatprep.subr.mxu0 0.0
        %697 = vmatpush1.xpose.msra.mxu0 %v657
        %698 = vmatprep.subr.mxu0 0.0
        %699 = vmatpush1.xpose.msra.mxu0 %v660
        %700 = vmatprep.subr.mxu0 0.0
        %701 = vmatpush1.xpose.msra.mxu0 %v663
        %702 = vmatprep.subr.mxu0 0.0
        %703 = vmatpush1.xpose.msra.mxu0 %v666
        %704 = vmatprep.subr.mxu0 0.0
        %705 = vmatpush1.xpose.msra.mxu0 %v669
        %706 = vmatprep.subr.mxu0 0.0
        %707 = vmatpush1.xpose.msra.mxu0 %v672
        %708 = vmatprep.subr.mxu0 0.0
        %709 = vmatpush1.xpose.msra.mxu0 %v675
        %710 = vmatprep.subr.mxu0 0.0
        %711 = vmatpush1.xpose.msra.mxu0 %v678
        %712 = vmatprep.subr.mxu0 0.0
        %713 = vmatpush1.xpose.msra.mxu0 0.0
        %714 = vmatprep.subr.mxu0 0.0
        %715 = vmatpush1.xpose.msra.mxu0 0.0
        %716 = vmatprep.subr.mxu0 0.0
        %717 = vmatpush1.xpose.msra.mxu0 0.0
        %718 = vmatprep.subr.mxu0 0.0
        %719 = vmatpush1.xpose.msra.mxu0 0.0
        %720 = vmatprep.subr.mxu0 0.0
        %721 = vmatpush1.xpose.msra.mxu0 0.0
        %722 = vmatprep.subr.mxu0 0.0
        %723 = vmatpush1.xpose.msra.mxu0 0.0
        %724 = vmatprep.subr.mxu0 0.0
        %725 = vmatpush1.xpose.msra.mxu0 0.0
        %726 = vmatprep.subr.mxu0 0.0
        %727 = vmatpush1.xpose.msra.mxu0 0.0
        %728 = vmatprep.subr.mxu0 0.0
        %729 = vmatpush1.xpose.msra.mxu0 0.0
        %730 = vmatprep.subr.mxu0 0.0
        %731 = vmatpush1.xpose.msra.mxu0 0.0
        %732 = vmatprep.subr.mxu0 0.0
        %733 = vmatpush1.xpose.msra.mxu0 0.0
        %734 = vmatprep.subr.mxu0 0.0
        %735 = vmatpush1.xpose.msra.mxu0 0.0
        %736 = vmatprep.subr.mxu0 0.0
        %737 = vmatpush1.xpose.msra.mxu0 0.0
        %738 = vmatprep.subr.mxu0 0.0
        %739 = vmatpush1.xpose.msra.mxu0 0.0
        %740 = vmatprep.subr.mxu0 0.0
        %741 = vmatpush1.xpose.msra.mxu0 0.0
        %742 = vmatprep.subr.mxu0 0.0
        %743 = vmatpush1.xpose.msra.mxu0 0.0
        %744 = vmatprep.mubr.f32.mxu0 0.0
        %745 = vmatmul.mubr.f32.gmra.mrb[0].mxu0 %v630
        %v746 = vpop.f32.mrb[0].mxu0
        %v747 = vadd.f32 %v628, %v746
        %v748 = vpop.f32.mrb[0].mxu0
        %749 = vdwg.mxu0
        %750 = vst [vmem:[%s272] sm:$0x1] %v747
        %s751 = sand.u32 %s182, 1
        %s752 = scalar_lea.sflag [#allocation4], %s751
        %s753 = sand.u32 %s182, 1
        %s754 = scalar_lea.vmem [#allocation3], %s753
        // Predicated region
        $region49: #{tpu_custom_call.1} parent=47 // pred_check
          %p755 = pneg %p192
        $region50: #{tpu_custom_call.1} parent=47 // pred_check_branch
          %757 = sbr.rel (%p755) target = $region52
        $region51: #{tpu_custom_call.1} parent=47 // pred_region
          %s759 = ssub.s32 16, 16
          %760 = vsyncadd %s752, %s759
          %s761 = smul.addr %s22, 16
          %s762 = scalar_lea.hbm %s7, %s761
          %s764 = sshll.u32 %s754, 4
          %s765 = int_to_ptr.vmem [resolvable:$true] %s764
          %767 = dma.vmem_to_hbm [thread:$0]  %s765, 16, %s762, %s752
        $region52: #{tpu_custom_call.1} parent=47 // pred_fallthru
          _
      $region48: #{tpu_custom_call.1} parent=5 // pred_fallthru
        _
      %p768 = scmp.le.s32.totalorder 2, %s17
      // Predicated region
      $region53: #{tpu_custom_call.1} parent=5 // pred_check
        %p769 = pneg %p768
      $region54: #{tpu_custom_call.1} parent=5 // pred_check_branch
        %771 = sbr.rel (%p769) target = $region56
      $region55: #{tpu_custom_call.1} parent=5 // pred_region
        %s772 = ssub.s32 %s17, 2
        // Predicated region
        $region57: #{tpu_custom_call.1} parent=55 // pred_check
          %p773 = pneg %p198
        $region58: #{tpu_custom_call.1} parent=55 // pred_check_branch
          %775 = sbr.rel (%p773) target = $region60
        $region59: #{tpu_custom_call.1} parent=55 // pred_region
          %s776 = sand.u32 %s183, 1
          %s777 = scalar_lea.sflag [#allocation4], %s776
          %s778 = sand.u32 %s183, 1
          %s779 = scalar_lea.vmem [#allocation3], %s778
          %780 = dma.done %s777, 16
        $region60: #{tpu_custom_call.1} parent=55 // pred_fallthru
          _
      $region56: #{tpu_custom_call.1} parent=5 // pred_fallthru
        _
    $region6: #{tpu_custom_call.1} parent=1 // loop_footer
      %s21 = sadd.s32 1, %s17
    $region7: #{tpu_custom_call.1} parent=1 // loop_footer_branch
      %16 = sbr.rel target = $region3
    $region8: #{tpu_custom_call.1} parent=1 // loop_exit
      _
    %781 = vsyncpa [#allocation4], 1
    %s782 = scalar_lea.sflag [#allocation4], 1
    %783 = vsyncpa %s782, 1

</llo_original>
